<compile_context>
chip_gen: v6e
topology: v6e:2x2x1
jax: 0.10.0
libtpu: 0.0.40
codegen_flags: <defaults>
</compile_context>

<pallas_src>
import functools

import jax
import jax.numpy as jnp
from jax import lax
from jax.experimental import pallas as pl
from jax.experimental.pallas import tpu as pltpu


def cbow_kernel(idx_ref, emb_ref, w_ref, b_ref, out_ref, *, precision):
    # idx_ref: (TB, C) int32      context word indices for this batch tile
    # emb_ref: (V, E)  f32/bf16   embedding table
    # w_ref:   (E, V)  f32/bf16   linear weight (transposed vs torch layout)
    # b_ref:   (1, V)  f32        linear bias
    # out_ref: (TB, V) f32        log-softmax output tile
    TB, C = idx_ref.shape
    V, E = emb_ref.shape

    idx = idx_ref[...]                                           # (TB, C)
    iota_v = lax.broadcasted_iota(jnp.int32, (TB, V), 1)         # (TB, V)

    # Bag-of-word counts: counts[b, v] = #{c : idx[b, c] == v}, accumulated in
    # f32 (exact for values <= C, native VPU on all chips).  Static unroll
    # keeps only a (TB, V) intermediate live instead of a (TB, C, V) one-hot.
    # TODO(synk): switch to lax.fori_loop(..., unroll=True) if C grows large.
    counts = jnp.zeros((TB, V), jnp.float32)
    for c in range(C):
        counts = counts + (iota_v == idx[:, c][:, None]).astype(jnp.float32)

    # Un-fused two-matmul form:
    #   summed = counts @ emb   (== gathered embedding rows summed over context)
    #   logits = summed @ W + b
    summed = jnp.dot(counts.astype(emb_ref.dtype), emb_ref[...],
                     preferred_element_type=jnp.float32,
                     precision=precision)                        # (TB, E)
    logits = jnp.dot(summed.astype(w_ref.dtype), w_ref[...],
                     preferred_element_type=jnp.float32,
                     precision=precision) + b_ref[...]           # (TB, V)

    # log_softmax along the vocab axis (all logits for this tile are resident).
    m = jnp.max(logits, axis=-1, keepdims=True)
    shifted = logits - m
    lse = jnp.log(jnp.sum(jnp.exp(shifted), axis=-1, keepdims=True))
    out_ref[...] = shifted - lse


def cbow_forward(inputs, emb_table, w, b, *, tb=None,
                 compute_dtype=jnp.float32, precision=None):
    """CBOW forward.

    inputs:        (B, C) int32 context indices
    emb_table:     (V, E) float32 embedding table
    w:             (E, V) float32 linear weight (transposed vs torch nn.Linear)
    b:             (V,)   float32 linear bias
    tb:            batch tile size.  Default: the whole batch, capped at 256,
                   so the toy batch runs as a single grid step while a large
                   batch still yields >= 2 "parallel" tiles for v7x's two
                   TensorCores (on v5e/v6e extra steps are pure overhead, so
                   one big tile per core is preferred).
    compute_dtype: dtype of the MXU operands (float32 exact / bfloat16 fast).
    precision:     optional lax.Precision for the in-kernel matmuls (e.g.
                   lax.Precision.HIGHEST for bit-tight f32 parity).
    """
    B, C = inputs.shape
    V, E = emb_table.shape
    assert w.shape == (E, V) and b.shape == (V,)

    if tb is None:
        tb = min(B, 256)
    assert B % tb == 0, "batch must be divisible by the batch tile size"

    emb_c = emb_table.astype(compute_dtype)
    w_c = w.astype(compute_dtype)
    b2d = b.reshape(1, V).astype(jnp.float32)

    kernel = functools.partial(cbow_kernel, precision=precision)

    grid = (B // tb,)
    return pl.pallas_call(
        kernel,
        out_shape=jax.ShapeDtypeStruct((B, V), jnp.float32),
        grid=grid,
        in_specs=[
            # Per-tile indices: the only operand that varies across the grid.
            pl.BlockSpec((tb, C), lambda i: (i, 0)),
            # Grid-invariant operands: always block (0, 0); single-buffered so
            # the pipeline does not duplicate blocks that never change.
            pl.BlockSpec((V, E), lambda i: (0, 0),
                         pipeline_mode=pl.Buffered(1)),
            pl.BlockSpec((E, V), lambda i: (0, 0),
                         pipeline_mode=pl.Buffered(1)),
            pl.BlockSpec((1, V), lambda i: (0, 0),
                         pipeline_mode=pl.Buffered(1)),
        ],
        out_specs=pl.BlockSpec((tb, V), lambda i: (i, 0)),
        compiler_params=pltpu.CompilerParams(
            dimension_semantics=("parallel",)),   # shard batch tiles over TCs
    )(inputs, emb_c, w_c, b2d)


def cbow_reference(inputs, emb_table, w, b):
    embeds = jnp.take(emb_table, inputs, axis=0)         # (B, C, E)
    summed = jnp.sum(embeds, axis=1)                     # (B, E)
    logits = summed @ w + b                              # (B, V)
    return jax.nn.log_softmax(logits, axis=-1)


if __name__ == "__main__":
    VOCAB = 128     # vocabulary size
    EMBED = 32      # embedding dim
    CONTEXT = 8     # context window
    BATCH = 16

    key = jax.random.PRNGKey(0)
    k_idx, k_emb, k_w, k_b = jax.random.split(key, 4)

    inputs = jax.random.randint(k_idx, (BATCH, CONTEXT), 0, VOCAB, dtype=jnp.int32)
    emb_table = jax.random.normal(k_emb, (VOCAB, EMBED), dtype=jnp.float32) * 0.1
    # torch nn.Linear(EMBED, VOCAB).weight has shape (VOCAB, EMBED); store transposed.
    w = jax.random.normal(k_w, (EMBED, VOCAB), dtype=jnp.float32) * 0.1
    b = jax.random.normal(k_b, (VOCAB,), dtype=jnp.float32) * 0.1

    ref = cbow_reference(inputs, emb_table, w, b)

    # f32 path: same math as the reference up to summation order.
    out_f32 = jax.block_until_ready(
        cbow_forward(inputs, emb_table, w, b, compute_dtype=jnp.float32))
    assert out_f32.shape == (BATCH, VOCAB)
    assert jnp.allclose(out_f32, ref, atol=1e-4, rtol=1e-4), "f32 path mismatch"

    # bf16 fast path: the counts operand is exact in bf16; the embedding/weight
    # operands round to bf16, hence the looser tolerance on the log-probs.
    out_bf16 = jax.block_until_ready(
        cbow_forward(inputs, emb_table, w, b, compute_dtype=jnp.bfloat16))
    assert out_bf16.shape == (BATCH, VOCAB)
    assert jnp.allclose(out_bf16, ref, atol=1e-2, rtol=0.0), "bf16 path mismatch"

    print("KERNEL_OK")
</pallas_src>

<mosaic_0001>
module attributes {stable_mosaic.version = 11 : i64} {
  func.func @cbow_kernel(%arg0: i32, %arg1: memref<16x8xi32, #tpu.memory_space<vmem>>, %arg2: memref<128x32xf32, #tpu.memory_space<vmem>>, %arg3: memref<32x128xf32, #tpu.memory_space<vmem>>, %arg4: memref<1x128xf32, #tpu.memory_space<vmem>>, %arg5: memref<16x128xf32, #tpu.memory_space<vmem>>) attributes {dimension_semantics = [#tpu.dimension_semantics<parallel>], iteration_bounds = array<i64: 1>, scalar_prefetch = 0 : i64, scratch_operands = 0 : i64, tpu.core_type = #tpu.core_type<tc>, window_params = [{transform_indices = @transform_0, window_bounds = array<i64: 16, 8>}, {pipeline_mode = #tpu.pipeline_mode<synchronous>, transform_indices = @transform_1, window_bounds = array<i64: 128, 32>}, {pipeline_mode = #tpu.pipeline_mode<synchronous>, transform_indices = @transform_2, window_bounds = array<i64: 32, 128>}, {pipeline_mode = #tpu.pipeline_mode<synchronous>, transform_indices = @transform_3, window_bounds = array<i64: 1, 128>}, {transform_indices = @transform_4, window_bounds = array<i64: 16, 128>}]} {
    %c0 = arith.constant 0 : index
    %c0_0 = arith.constant 0 : index
    %0 = vector.load %arg1[%c0, %c0_0] : memref<16x8xi32, #tpu.memory_space<vmem>>, vector<16x8xi32>
    %1 = tpu.iota {dimensions = array<i32: 1>} : vector<16x128xi32>
    %cst = arith.constant 0.000000e+00 : f32
    %2 = vector.broadcast %cst : f32 to vector<16x128xf32>
    %3 = vector.extract_strided_slice %0 {offsets = [0, 0], sizes = [16, 1], strides = [1, 1]} : vector<16x8xi32> to vector<16x1xi32>
    %4 = vector.shape_cast %3 : vector<16x1xi32> to vector<16xi32>
    %5 = vector.shape_cast %4 : vector<16xi32> to vector<16x1xi32>
    %6 = vector.broadcast %5 : vector<16x1xi32> to vector<16x128xi32>
    %7 = arith.cmpi eq, %1, %6 : vector<16x128xi32>
    %8 = arith.extui %7 : vector<16x128xi1> to vector<16x128xi32>
    %9 = arith.sitofp %8 : vector<16x128xi32> to vector<16x128xf32>
    %10 = arith.addf %2, %9 : vector<16x128xf32>
    %11 = vector.extract_strided_slice %0 {offsets = [0, 1], sizes = [16, 1], strides = [1, 1]} : vector<16x8xi32> to vector<16x1xi32>
    %12 = vector.shape_cast %11 : vector<16x1xi32> to vector<16xi32>
    %13 = vector.shape_cast %12 : vector<16xi32> to vector<16x1xi32>
    %14 = vector.broadcast %13 : vector<16x1xi32> to vector<16x128xi32>
    %15 = arith.cmpi eq, %1, %14 : vector<16x128xi32>
    %16 = arith.extui %15 : vector<16x128xi1> to vector<16x128xi32>
    %17 = arith.sitofp %16 : vector<16x128xi32> to vector<16x128xf32>
    %18 = arith.addf %10, %17 : vector<16x128xf32>
    %19 = vector.extract_strided_slice %0 {offsets = [0, 2], sizes = [16, 1], strides = [1, 1]} : vector<16x8xi32> to vector<16x1xi32>
    %20 = vector.shape_cast %19 : vector<16x1xi32> to vector<16xi32>
    %21 = vector.shape_cast %20 : vector<16xi32> to vector<16x1xi32>
    %22 = vector.broadcast %21 : vector<16x1xi32> to vector<16x128xi32>
    %23 = arith.cmpi eq, %1, %22 : vector<16x128xi32>
    %24 = arith.extui %23 : vector<16x128xi1> to vector<16x128xi32>
    %25 = arith.sitofp %24 : vector<16x128xi32> to vector<16x128xf32>
    %26 = arith.addf %18, %25 : vector<16x128xf32>
    %27 = vector.extract_strided_slice %0 {offsets = [0, 3], sizes = [16, 1], strides = [1, 1]} : vector<16x8xi32> to vector<16x1xi32>
    %28 = vector.shape_cast %27 : vector<16x1xi32> to vector<16xi32>
    %29 = vector.shape_cast %28 : vector<16xi32> to vector<16x1xi32>
    %30 = vector.broadcast %29 : vector<16x1xi32> to vector<16x128xi32>
    %31 = arith.cmpi eq, %1, %30 : vector<16x128xi32>
    %32 = arith.extui %31 : vector<16x128xi1> to vector<16x128xi32>
    %33 = arith.sitofp %32 : vector<16x128xi32> to vector<16x128xf32>
    %34 = arith.addf %26, %33 : vector<16x128xf32>
    %35 = vector.extract_strided_slice %0 {offsets = [0, 4], sizes = [16, 1], strides = [1, 1]} : vector<16x8xi32> to vector<16x1xi32>
    %36 = vector.shape_cast %35 : vector<16x1xi32> to vector<16xi32>
    %37 = vector.shape_cast %36 : vector<16xi32> to vector<16x1xi32>
    %38 = vector.broadcast %37 : vector<16x1xi32> to vector<16x128xi32>
    %39 = arith.cmpi eq, %1, %38 : vector<16x128xi32>
    %40 = arith.extui %39 : vector<16x128xi1> to vector<16x128xi32>
    %41 = arith.sitofp %40 : vector<16x128xi32> to vector<16x128xf32>
    %42 = arith.addf %34, %41 : vector<16x128xf32>
    %43 = vector.extract_strided_slice %0 {offsets = [0, 5], sizes = [16, 1], strides = [1, 1]} : vector<16x8xi32> to vector<16x1xi32>
    %44 = vector.shape_cast %43 : vector<16x1xi32> to vector<16xi32>
    %45 = vector.shape_cast %44 : vector<16xi32> to vector<16x1xi32>
    %46 = vector.broadcast %45 : vector<16x1xi32> to vector<16x128xi32>
    %47 = arith.cmpi eq, %1, %46 : vector<16x128xi32>
    %48 = arith.extui %47 : vector<16x128xi1> to vector<16x128xi32>
    %49 = arith.sitofp %48 : vector<16x128xi32> to vector<16x128xf32>
    %50 = arith.addf %42, %49 : vector<16x128xf32>
    %51 = vector.extract_strided_slice %0 {offsets = [0, 6], sizes = [16, 1], strides = [1, 1]} : vector<16x8xi32> to vector<16x1xi32>
    %52 = vector.shape_cast %51 : vector<16x1xi32> to vector<16xi32>
    %53 = vector.shape_cast %52 : vector<16xi32> to vector<16x1xi32>
    %54 = vector.broadcast %53 : vector<16x1xi32> to vector<16x128xi32>
    %55 = arith.cmpi eq, %1, %54 : vector<16x128xi32>
    %56 = arith.extui %55 : vector<16x128xi1> to vector<16x128xi32>
    %57 = arith.sitofp %56 : vector<16x128xi32> to vector<16x128xf32>
    %58 = arith.addf %50, %57 : vector<16x128xf32>
    %59 = vector.extract_strided_slice %0 {offsets = [0, 7], sizes = [16, 1], strides = [1, 1]} : vector<16x8xi32> to vector<16x1xi32>
    %60 = vector.shape_cast %59 : vector<16x1xi32> to vector<16xi32>
    %61 = vector.shape_cast %60 : vector<16xi32> to vector<16x1xi32>
    %62 = vector.broadcast %61 : vector<16x1xi32> to vector<16x128xi32>
    %63 = arith.cmpi eq, %1, %62 : vector<16x128xi32>
    %64 = arith.extui %63 : vector<16x128xi1> to vector<16x128xi32>
    %65 = arith.sitofp %64 : vector<16x128xi32> to vector<16x128xf32>
    %66 = arith.addf %58, %65 : vector<16x128xf32>
    %c0_1 = arith.constant 0 : index
    %c0_2 = arith.constant 0 : index
    %67 = vector.load %arg2[%c0_1, %c0_2] : memref<128x32xf32, #tpu.memory_space<vmem>>, vector<128x32xf32>
    %cst_3 = arith.constant dense<0.000000e+00> : vector<16x32xf32>
    %68 = tpu.matmul %66, %67, %cst_3 {dimension_numbers = #tpu.dot_dimension_numbers<[1], [0], [0], [1], [0, 0, 1, 1], [], []>} : vector<16x128xf32>, vector<128x32xf32>, vector<16x32xf32> -> vector<16x32xf32>
    %c0_4 = arith.constant 0 : index
    %c0_5 = arith.constant 0 : index
    %69 = vector.load %arg3[%c0_4, %c0_5] : memref<32x128xf32, #tpu.memory_space<vmem>>, vector<32x128xf32>
    %cst_6 = arith.constant dense<0.000000e+00> : vector<16x128xf32>
    %70 = tpu.matmul %68, %69, %cst_6 {dimension_numbers = #tpu.dot_dimension_numbers<[1], [0], [0], [1], [0, 0, 1, 1], [], []>} : vector<16x32xf32>, vector<32x128xf32>, vector<16x128xf32> -> vector<16x128xf32>
    %c0_7 = arith.constant 0 : index
    %c0_8 = arith.constant 0 : index
    %71 = vector.load %arg4[%c0_7, %c0_8] : memref<1x128xf32, #tpu.memory_space<vmem>>, vector<1x128xf32>
    %72 = vector.broadcast %71 : vector<1x128xf32> to vector<16x128xf32>
    %73 = arith.addf %70, %72 : vector<16x128xf32>
    %cst_9 = arith.constant dense<0xFF800000> : vector<16xf32>
    %74 = vector.multi_reduction <maximumf>, %73, %cst_9 [1] : vector<16x128xf32> to vector<16xf32>
    %75 = vector.shape_cast %74 : vector<16xf32> to vector<16x1xf32>
    %76 = vector.broadcast %75 : vector<16x1xf32> to vector<16x128xf32>
    %77 = arith.subf %73, %76 : vector<16x128xf32>
    %78 = math.exp %77 : vector<16x128xf32>
    %cst_10 = arith.constant dense<0.000000e+00> : vector<16xf32>
    %79 = vector.multi_reduction <add>, %78, %cst_10 [1] : vector<16x128xf32> to vector<16xf32>
    %80 = vector.shape_cast %79 : vector<16xf32> to vector<16x1xf32>
    %81 = math.log %80 : vector<16x1xf32>
    %82 = vector.broadcast %81 : vector<16x1xf32> to vector<16x128xf32>
    %83 = arith.subf %77, %82 : vector<16x128xf32>
    %c0_11 = arith.constant 0 : index
    %c0_12 = arith.constant 0 : index
    %84 = vector.load %arg5[%c0_11, %c0_12] : memref<16x128xf32, #tpu.memory_space<vmem>>, vector<16x128xf32>
    tpu.vector_store %arg5[%c0_11, %c0_12], %83 {strides = array<i32>} : memref<16x128xf32, #tpu.memory_space<vmem>>, vector<16x128xf32>,
    return
  }
  func.func @transform_0(%arg0: i32) -> (i32, i32) {
    %c0_i32 = arith.constant 0 : i32
    %c0_i32_0 = arith.constant 0 : i32
    return %arg0, %c0_i32 : i32, i32
  }
  func.func @transform_1(%arg0: i32) -> (i32, i32) {
    %c0_i32 = arith.constant 0 : i32
    %c0_i32_0 = arith.constant 0 : i32
    %c0_i32_1 = arith.constant 0 : i32
    return %c0_i32, %c0_i32_0 : i32, i32
  }
  func.func @transform_2(%arg0: i32) -> (i32, i32) {
    %c0_i32 = arith.constant 0 : i32
    %c0_i32_0 = arith.constant 0 : i32
    %c0_i32_1 = arith.constant 0 : i32
    return %c0_i32, %c0_i32_0 : i32, i32
  }
  func.func @transform_3(%arg0: i32) -> (i32, i32) {
    %c0_i32 = arith.constant 0 : i32
    %c0_i32_0 = arith.constant 0 : i32
    %c0_i32_1 = arith.constant 0 : i32
    return %c0_i32, %c0_i32_0 : i32, i32
  }
  func.func @transform_4(%arg0: i32) -> (i32, i32) {
    %c0_i32 = arith.constant 0 : i32
    %c0_i32_0 = arith.constant 0 : i32
    return %arg0, %c0_i32 : i32, i32
  }
}

</mosaic_0001>

<llo_original>
// kernel: tpu_custom_call.1
$region0: #{tpu_custom_call.1}
  #allocation0 [shape = 'u32[]', space=smem, size = 0x4, offset = 0x4, fixed_abs, tag = 'smem constant byte address 0x4 - core index']
  #allocation1 [shape = 'u32[144,128]{1,0:T(1,128)}', space=vmem, size = 0x12000, scoped, tag = 'internal scratch']
  %s0 = inlined_call_operand.vmem [shape: s32[16,8], index: 0, kind: input, shape index: {}]
  %s1 = inlined_call_operand.vmem [shape: f32[128,32], index: 1, kind: input, shape index: {}]
  %s2 = inlined_call_operand.vmem [shape: f32[32,128], index: 2, kind: input, shape index: {}]
  %s3 = inlined_call_operand.vmem [shape: f32[1,128], index: 3, kind: input, shape index: {}]
  %s4 = inlined_call_operand.hbm [shape: f32[16,128], index: 4, kind: output, shape index: {}]
  %s5 = sld [smem:[#allocation0]]
  $region26: #{tpu_custom_call.1} parent=0
    _
  %s7 = ssub.s32 1, %s5
  %s8 = scalar_select 0, %s7, %s5
  $region1: #{tpu_custom_call.1} parent=0
    #allocation2 [shape = 'u8[8192]{0}', space=vmem, size = 0x2000, scoped, tag = 'output window, operand 0, single buffered']
    #allocation3 [shape = 's32[1]{0}', space=sflag, size = 0x4, scoped, tag = 'scoped memory for tpu_custom_call.1']
    %9 = vsyncpa [#allocation3], 0
    // Predicated region
    $region2: #{tpu_custom_call.1} parent=1 // pred_check
      _
    $region3: #{tpu_custom_call.1} parent=1 // pred_check_branch
      %11 = sbr.rel (0) target = $region5
    $region4: #{tpu_custom_call.1} parent=1 // pred_region
      _
    $region5: #{tpu_custom_call.1} parent=1 // pred_fallthru
      _
    // Predicated region
    $region6: #{tpu_custom_call.1} parent=1 // pred_check
      _
    $region7: #{tpu_custom_call.1} parent=1 // pred_check_branch
      %13 = sbr.rel (0) target = $region9
    $region8: #{tpu_custom_call.1} parent=1 // pred_region
      _
    $region9: #{tpu_custom_call.1} parent=1 // pred_fallthru
      _
    // Predicated region
    $region10: #{tpu_custom_call.1} parent=1 // pred_check
      _
    $region11: #{tpu_custom_call.1} parent=1 // pred_check_branch
      %15 = sbr.rel (0) target = $region13
    $region12: #{tpu_custom_call.1} parent=1 // pred_region
      _
    $region13: #{tpu_custom_call.1} parent=1 // pred_fallthru
      _
    // Predicated region
    $region14: #{tpu_custom_call.1} parent=1 // pred_check
      _
    $region15: #{tpu_custom_call.1} parent=1 // pred_check_branch
      %17 = sbr.rel (0) target = $region17
    $region16: #{tpu_custom_call.1} parent=1 // pred_region
      _
    $region17: #{tpu_custom_call.1} parent=1 // pred_fallthru
      _
    %v18 = vld [vmem:[%s0] sm:$0xff]
    %v19 = vld [vmem:[%s0 + $0x8] sm:$0xff]
    %v20 = vlaneseq
    %v21 = vand.u32 %v20, 127
    %22 = vset.pattern.permute.xlu0 0
    %23 = vperm.xlu0 %22, %v18
    %v24 = vpop.permute.xlu0 %23
    %25 = vset.pattern.permute.xlu0 0
    %26 = vperm.xlu0 %25, %v19
    %v27 = vpop.permute.xlu0 %26
    %vm28 = vcmp.eq.s32.totalorder %v21, %v24
    %vm29 = vcmp.eq.s32.totalorder %v21, %v27
    %v30 = vsel %vm28, 1, 0
    %v31 = vsel %vm29, 1, 0
    %v32 = vcvt.s32.f32 %v30
    %v33 = vcvt.s32.f32 %v31
    %v34 = vadd.f32 %v32, 0.0
    %v35 = vadd.f32 %v33, 0.0
    %36 = vset.pattern.permute.xlu0 1
    %37 = vperm.xlu0 %36, %v18
    %v38 = vpop.permute.xlu0 %37
    %39 = vset.pattern.permute.xlu0 1
    %40 = vperm.xlu0 %39, %v19
    %v41 = vpop.permute.xlu0 %40
    %vm42 = vcmp.eq.s32.totalorder %v21, %v38
    %vm43 = vcmp.eq.s32.totalorder %v21, %v41
    %v44 = vsel %vm42, 1, 0
    %v45 = vsel %vm43, 1, 0
    %v46 = vcvt.s32.f32 %v44
    %v47 = vcvt.s32.f32 %v45
    %v48 = vadd.f32 %v34, %v46
    %v49 = vadd.f32 %v35, %v47
    %50 = vset.pattern.permute.xlu0 2
    %51 = vperm.xlu0 %50, %v18
    %v52 = vpop.permute.xlu0 %51
    %53 = vset.pattern.permute.xlu0 2
    %54 = vperm.xlu0 %53, %v19
    %v55 = vpop.permute.xlu0 %54
    %vm56 = vcmp.eq.s32.totalorder %v21, %v52
    %vm57 = vcmp.eq.s32.totalorder %v21, %v55
    %v58 = vsel %vm56, 1, 0
    %v59 = vsel %vm57, 1, 0
    %v60 = vcvt.s32.f32 %v58
    %v61 = vcvt.s32.f32 %v59
    %v62 = vadd.f32 %v48, %v60
    %v63 = vadd.f32 %v49, %v61
    %64 = vset.pattern.permute.xlu0 3
    %65 = vperm.xlu0 %64, %v18
    %v66 = vpop.permute.xlu0 %65
    %67 = vset.pattern.permute.xlu0 3
    %68 = vperm.xlu0 %67, %v19
    %v69 = vpop.permute.xlu0 %68
    %vm70 = vcmp.eq.s32.totalorder %v21, %v66
    %vm71 = vcmp.eq.s32.totalorder %v21, %v69
    %v72 = vsel %vm70, 1, 0
    %v73 = vsel %vm71, 1, 0
    %v74 = vcvt.s32.f32 %v72
    %v75 = vcvt.s32.f32 %v73
    %v76 = vadd.f32 %v62, %v74
    %v77 = vadd.f32 %v63, %v75
    %78 = vset.pattern.permute.xlu0 4
    %79 = vperm.xlu0 %78, %v18
    %v80 = vpop.permute.xlu0 %79
    %81 = vset.pattern.permute.xlu0 4
    %82 = vperm.xlu0 %81, %v19
    %v83 = vpop.permute.xlu0 %82
    %vm84 = vcmp.eq.s32.totalorder %v21, %v80
    %vm85 = vcmp.eq.s32.totalorder %v21, %v83
    %v86 = vsel %vm84, 1, 0
    %v87 = vsel %vm85, 1, 0
    %v88 = vcvt.s32.f32 %v86
    %v89 = vcvt.s32.f32 %v87
    %v90 = vadd.f32 %v76, %v88
    %v91 = vadd.f32 %v77, %v89
    %92 = vset.pattern.permute.xlu0 5
    %93 = vperm.xlu0 %92, %v18
    %v94 = vpop.permute.xlu0 %93
    %95 = vset.pattern.permute.xlu0 5
    %96 = vperm.xlu0 %95, %v19
    %v97 = vpop.permute.xlu0 %96
    %vm98 = vcmp.eq.s32.totalorder %v21, %v94
    %vm99 = vcmp.eq.s32.totalorder %v21, %v97
    %v100 = vsel %vm98, 1, 0
    %v101 = vsel %vm99, 1, 0
    %v102 = vcvt.s32.f32 %v100
    %v103 = vcvt.s32.f32 %v101
    %v104 = vadd.f32 %v90, %v102
    %v105 = vadd.f32 %v91, %v103
    %106 = vset.pattern.permute.xlu0 6
    %107 = vperm.xlu0 %106, %v18
    %v108 = vpop.permute.xlu0 %107
    %109 = vset.pattern.permute.xlu0 6
    %110 = vperm.xlu0 %109, %v19
    %v111 = vpop.permute.xlu0 %110
    %vm112 = vcmp.eq.s32.totalorder %v21, %v108
    %vm113 = vcmp.eq.s32.totalorder %v21, %v111
    %v114 = vsel %vm112, 1, 0
    %v115 = vsel %vm113, 1, 0
    %v116 = vcvt.s32.f32 %v114
    %v117 = vcvt.s32.f32 %v115
    %v118 = vadd.f32 %v104, %v116
    %v119 = vadd.f32 %v105, %v117
    %120 = vset.pattern.permute.xlu0 7
    %121 = vperm.xlu0 %120, %v18
    %v122 = vpop.permute.xlu0 %121
    %123 = vset.pattern.permute.xlu0 7
    %124 = vperm.xlu0 %123, %v19
    %v125 = vpop.permute.xlu0 %124
    %vm126 = vcmp.eq.s32.totalorder %v21, %v122
    %vm127 = vcmp.eq.s32.totalorder %v21, %v125
    %v128 = vsel %vm126, 1, 0
    %v129 = vsel %vm127, 1, 0
    %v130 = vcvt.s32.f32 %v128
    %v131 = vcvt.s32.f32 %v129
    %v132 = vadd.f32 %v118, %v130
    %v133 = vadd.f32 %v119, %v131
    %v134 = vld [vmem:[%s1] sm:$0xff]
    %v135 = vld [vmem:[%s1 + $0x8] sm:$0xff]
    %v136 = vld [vmem:[%s1 + $0x10] sm:$0xff]
    %v137 = vld [vmem:[%s1 + $0x18] sm:$0xff]
    %v138 = vld [vmem:[%s1 + $0x20] sm:$0xff]
    %v139 = vld [vmem:[%s1 + $0x28] sm:$0xff]
    %v140 = vld [vmem:[%s1 + $0x30] sm:$0xff]
    %v141 = vld [vmem:[%s1 + $0x38] sm:$0xff]
    %v142 = vld [vmem:[%s1 + $0x40] sm:$0xff]
    %v143 = vld [vmem:[%s1 + $0x48] sm:$0xff]
    %v144 = vld [vmem:[%s1 + $0x50] sm:$0xff]
    %v145 = vld [vmem:[%s1 + $0x58] sm:$0xff]
    %v146 = vld [vmem:[%s1 + $0x60] sm:$0xff]
    %v147 = vld [vmem:[%s1 + $0x68] sm:$0xff]
    %v148 = vld [vmem:[%s1 + $0x70] sm:$0xff]
    %v149 = vld [vmem:[%s1 + $0x78] sm:$0xff]
    %150 = vmatprep.subr.mxu0 0.0
    %151 = vmatpush1.msra.mxu0 %v149
    %152 = vmatprep.subr.mxu0 0.0
    %153 = vmatpush1.msra.mxu0 %v148
    %154 = vmatprep.subr.mxu0 0.0
    %155 = vmatpush1.msra.mxu0 %v147
    %156 = vmatprep.subr.mxu0 0.0
    %157 = vmatpush1.msra.mxu0 %v146
    %158 = vmatprep.subr.mxu0 0.0
    %159 = vmatpush1.msra.mxu0 %v145
    %160 = vmatprep.subr.mxu0 0.0
    %161 = vmatpush1.msra.mxu0 %v144
    %162 = vmatprep.subr.mxu0 0.0
    %163 = vmatpush1.msra.mxu0 %v143
    %164 = vmatprep.subr.mxu0 0.0
    %165 = vmatpush1.msra.mxu0 %v142
    %166 = vmatprep.subr.mxu0 0.0
    %167 = vmatpush1.msra.mxu0 %v141
    %168 = vmatprep.subr.mxu0 0.0
    %169 = vmatpush1.msra.mxu0 %v140
    %170 = vmatprep.subr.mxu0 0.0
    %171 = vmatpush1.msra.mxu0 %v139
    %172 = vmatprep.subr.mxu0 0.0
    %173 = vmatpush1.msra.mxu0 %v138
    %174 = vmatprep.subr.mxu0 0.0
    %175 = vmatpush1.msra.mxu0 %v137
    %176 = vmatprep.subr.mxu0 0.0
    %177 = vmatpush1.msra.mxu0 %v136
    %178 = vmatprep.subr.mxu0 0.0
    %179 = vmatpush1.msra.mxu0 %v135
    %180 = vmatprep.subr.mxu0 0.0
    %181 = vmatpush1.msra.mxu0 %v134
    %182 = vmatprep.subr.mxu0 0.0
    %183 = vmatpush2.msra.mxu0 0.0
    %184 = vmatprep.subr.mxu0 0.0
    %185 = vmatpush2.msra.mxu0 0.0
    %186 = vmatprep.subr.mxu0 0.0
    %187 = vmatpush2.msra.mxu0 0.0
    %188 = vmatprep.subr.mxu0 0.0
    %189 = vmatpush2.msra.mxu0 0.0
    %190 = vmatprep.subr.mxu0 0.0
    %191 = vmatpush2.msra.mxu0 0.0
    %192 = vmatprep.subr.mxu0 0.0
    %193 = vmatpush2.msra.mxu0 0.0
    %194 = vmatprep.subr.mxu0 0.0
    %195 = vmatpush2.msra.mxu0 0.0
    %196 = vmatprep.subr.mxu0 0.0
    %197 = vmatpush2.msra.mxu0 0.0
    %198 = vmatprep.subr.mxu0 0.0
    %199 = vmatpush2.msra.mxu0 0.0
    %200 = vmatprep.subr.mxu0 0.0
    %201 = vmatpush2.msra.mxu0 0.0
    %202 = vmatprep.subr.mxu0 0.0
    %203 = vmatpush2.msra.mxu0 0.0
    %204 = vmatprep.subr.mxu0 0.0
    %205 = vmatpush2.msra.mxu0 0.0
    %206 = vmatprep.subr.mxu0 0.0
    %207 = vmatpush2.msra.mxu0 0.0
    %208 = vmatprep.subr.mxu0 0.0
    %209 = vmatpush2.msra.mxu0 0.0
    %210 = vmatprep.subr.mxu0 0.0
    %211 = vmatpush2.msra.mxu0 0.0
    %212 = vmatprep.subr.mxu0 0.0
    %213 = vmatpush2.msra.mxu0 0.0
    %214 = vmatprep.mubr.f32.mxu0 0.0
    %215 = vmatmul.mubr.f32.gmra.mxu0 %v132
    %v216 = vpop.f32.mrf.mxu0
    %v217 = vadd.f32 0.0, %v216
    %v218 = vpop.f32.mrf.mxu0
    %219 = vmatprep.mubr.f32.mxu0 0.0
    %220 = vmatmul.mubr.f32.gmra.mxu0 %v133
    %v221 = vpop.f32.mrf.mxu0
    %v222 = vadd.f32 0.0, %v221
    %v223 = vpop.f32.mrf.mxu0
    %224 = vdwg.mxu0
    %v225 = vld [vmem:[%s2] sm:$0xff]
    %v226 = vld [vmem:[%s2 + $0x8] sm:$0xff]
    %v227 = vld [vmem:[%s2 + $0x10] sm:$0xff]
    %v228 = vld [vmem:[%s2 + $0x18] sm:$0xff]
    %v229 = vld [vmem:[%s3] sm:$0x1]
    %v231 = vlaneseq
    %v232 = vshrl.u32 %v231, 7
    %v233 = vsub.s32 0, %v232
    %v234 = vrot.slane %v229, %v233
    %vm236 = vcmask 261120
    %v238 = vsel %vm236, %v217, 0
    %v241 = vsel %vm236, %v222, 0
    %243 = vmatprep.subr.mxu0 0.0
    %244 = vmatpush1.msra.mxu0 0.0
    %245 = vmatprep.subr.mxu0 0.0
    %246 = vmatpush1.msra.mxu0 0.0
    %247 = vmatprep.subr.mxu0 0.0
    %248 = vmatpush1.msra.mxu0 0.0
    %249 = vmatprep.subr.mxu0 0.0
    %250 = vmatpush1.msra.mxu0 0.0
    %251 = vmatprep.subr.mxu0 0.0
    %252 = vmatpush1.msra.mxu0 0.0
    %253 = vmatprep.subr.mxu0 0.0
    %254 = vmatpush1.msra.mxu0 0.0
    %255 = vmatprep.subr.mxu0 0.0
    %256 = vmatpush1.msra.mxu0 0.0
    %257 = vmatprep.subr.mxu0 0.0
    %258 = vmatpush1.msra.mxu0 0.0
    %259 = vmatprep.subr.mxu0 0.0
    %260 = vmatpush1.msra.mxu0 0.0
    %261 = vmatprep.subr.mxu0 0.0
    %262 = vmatpush1.msra.mxu0 0.0
    %263 = vmatprep.subr.mxu0 0.0
    %264 = vmatpush1.msra.mxu0 0.0
    %265 = vmatprep.subr.mxu0 0.0
    %266 = vmatpush1.msra.mxu0 0.0
    %267 = vmatprep.subr.mxu0 0.0
    %268 = vmatpush1.msra.mxu0 %v228
    %269 = vmatprep.subr.mxu0 0.0
    %270 = vmatpush1.msra.mxu0 %v227
    %271 = vmatprep.subr.mxu0 0.0
    %272 = vmatpush1.msra.mxu0 %v226
    %273 = vmatprep.subr.mxu0 0.0
    %274 = vmatpush1.msra.mxu0 %v225
    %275 = vmatprep.subr.mxu0 0.0
    %276 = vmatpush2.msra.mxu0 0.0
    %277 = vmatprep.subr.mxu0 0.0
    %278 = vmatpush2.msra.mxu0 0.0
    %279 = vmatprep.subr.mxu0 0.0
    %280 = vmatpush2.msra.mxu0 0.0
    %281 = vmatprep.subr.mxu0 0.0
    %282 = vmatpush2.msra.mxu0 0.0
    %283 = vmatprep.subr.mxu0 0.0
    %284 = vmatpush2.msra.mxu0 0.0
    %285 = vmatprep.subr.mxu0 0.0
    %286 = vmatpush2.msra.mxu0 0.0
    %287 = vmatprep.subr.mxu0 0.0
    %288 = vmatpush2.msra.mxu0 0.0
    %289 = vmatprep.subr.mxu0 0.0
    %290 = vmatpush2.msra.mxu0 0.0
    %291 = vmatprep.subr.mxu0 0.0
    %292 = vmatpush2.msra.mxu0 0.0
    %293 = vmatprep.subr.mxu0 0.0
    %294 = vmatpush2.msra.mxu0 0.0
    %295 = vmatprep.subr.mxu0 0.0
    %296 = vmatpush2.msra.mxu0 0.0
    %297 = vmatprep.subr.mxu0 0.0
    %298 = vmatpush2.msra.mxu0 0.0
    %299 = vmatprep.subr.mxu0 0.0
    %300 = vmatpush2.msra.mxu0 0.0
    %301 = vmatprep.subr.mxu0 0.0
    %302 = vmatpush2.msra.mxu0 0.0
    %303 = vmatprep.subr.mxu0 0.0
    %304 = vmatpush2.msra.mxu0 0.0
    %305 = vmatprep.subr.mxu0 0.0
    %306 = vmatpush2.msra.mxu0 0.0
    %307 = vmatprep.mubr.f32.mxu0 0.0
    %308 = vmatmul.mubr.f32.gmra.mxu0 %v238
    %v309 = vpop.f32.mrf.mxu0
    %v310 = vadd.f32 %v234, %v309
    %v311 = vpop.f32.mrf.mxu0
    %312 = vmatprep.mubr.f32.mxu0 0.0
    %313 = vmatmul.mubr.f32.gmra.mxu0 %v241
    %v314 = vpop.f32.mrf.mxu0
    %v315 = vadd.f32 %v234, %v314
    %v316 = vpop.f32.mrf.mxu0
    %317 = vdwg.mxu0
    %318 = vmax.xlane.f32.xlu0 %v310
    %v319 = vpop.xlane.xlu0 %318
    %320 = vmax.xlane.f32.xlu0 %v315
    %v321 = vpop.xlane.xlu0 %320
    %v322 = vsub.f32 %v310, %v319
    %v323 = vsub.f32 %v315, %v321
    %v324 = vmul.f32 %v322, 1.442695
    %v325 = vpow.pop %v324
    %v326 = vmul.f32 %v323, 1.442695
    %v327 = vpow.pop %v326
    %328 = vadd.xlane.f32.xlu0 %v325
    %v329 = vpop.xlane.xlu0 %328
    %330 = vadd.xlane.f32.xlu0 %v327
    %v331 = vpop.xlane.xlu0 %330
    %v332 = vlog2.pop %v329
    %v333 = vmul.f32 %v332, 0.6931472
    %v334 = vlog2.pop %v331
    %v335 = vmul.f32 %v334, 0.6931472
    %v336 = vsub.f32 %v322, %v333
    %v337 = vsub.f32 %v323, %v335
    %338 = vst [vmem:[#allocation2] sm:$0xff] %v336
    %339 = vst [vmem:[#allocation2 + $0x8] sm:$0xff] %v337
    // Predicated region
    $region18: #{tpu_custom_call.1} parent=1 // pred_check
      _
    $region19: #{tpu_custom_call.1} parent=1 // pred_check_branch
      %341 = sbr.rel (0) target = $region21
    $region20: #{tpu_custom_call.1} parent=1 // pred_region
      %s343 = ssub.s32 256, 256
      %344 = vsyncadd [#allocation3], %s343
      %s345 = sshll.u32 [#allocation2], 4
      %s346 = int_to_ptr.vmem [resolvable:$true] %s345
      %351 = dma.vmem_to_hbm [thread:$0]  %s346, 256, %s4, [#allocation3], 128, 128, 8
    $region21: #{tpu_custom_call.1} parent=1 // pred_fallthru
      _
    // Predicated region
    $region22: #{tpu_custom_call.1} parent=1 // pred_check
      _
    $region23: #{tpu_custom_call.1} parent=1 // pred_check_branch
      %353 = sbr.rel (0) target = $region25
    $region24: #{tpu_custom_call.1} parent=1 // pred_region
      %354 = dma.done [#allocation3], 256
    $region25: #{tpu_custom_call.1} parent=1 // pred_fallthru
      _
    %355 = vsyncpa [#allocation3], 1

</llo_original>
